<compile_context>
chip_gen: v5e
topology: v5e:2x2
jax: 0.10.0
libtpu: 0.0.40
codegen_flags: <defaults>
</compile_context>

<pallas_src>
import jax
import jax.numpy as jnp
from jax.experimental import pallas as pl
from jax.experimental.pallas import tpu as pltpu


def _add_kernel(t_ref, v_ref, o_ref):
    # Pure VPU elementwise add on the current (tile_rows, width) VMEM tile.
    # Dtype promotion / output cast happens on loaded vregs, not in HBM.
    o_ref[...] = (t_ref[...] + v_ref[...]).astype(o_ref.dtype)


def _sublane_multiple(itemsize: int) -> int:
    # f32 -> 8, bf16/f16 -> 16, int8/fp8 -> 32 (sub-32-bit packs along sublanes).
    return max(8, 32 // max(1, itemsize))


def _pick_width(n: int, sublane_mult: int) -> int:
    """Widest lane-dense last dim (multiple of 128) that divides n exactly,
    preferring factorings that leave at least `sublane_mult` rows."""
    candidates = (8192, 4096, 2048, 1024, 512, 256, 128)
    for w in candidates:
        if n % w == 0 and n // w >= sublane_mult:
            return w
    for w in candidates:
        if n % w == 0:
            return w
    return 0  # no lossless factoring -> XLA fallback (never pad/copy full inputs)


def _target_block_bytes() -> int:
    """Per-buffer tile target: 4 MiB on v7x, 2 MiB on v5e/v6e (and unknown)."""
    try:
        kind = jax.devices()[0].device_kind.lower()
    except Exception:
        kind = ""
    if ("v7" in kind) or ("7x" in kind):
        return 4 * 1024 * 1024
    return 2 * 1024 * 1024


_FASTPATH_BYTES = 256 * 1024  # below this, launch overhead dominates -> XLA add


def addition_fusion(t: jax.Array, v: jax.Array) -> jax.Array:
    """Pallas implementation of additionFusion.forward: returns t + v."""
    out_shape = jnp.broadcast_shapes(t.shape, v.shape)
    out_dtype = jnp.result_type(t.dtype, v.dtype)

    n = 1
    for d in out_shape:
        n *= d

    itemsizes = (
        jnp.dtype(t.dtype).itemsize,
        jnp.dtype(v.dtype).itemsize,
        jnp.dtype(out_dtype).itemsize,
    )
    max_itemsize = max(itemsizes)
    sum_itemsize = sum(itemsizes)
    sublane_mult = max(_sublane_multiple(i) for i in itemsizes)

    # ---- fallback paths where a Pallas launch cannot beat XLA's fused add ----
    #  * tiny tensors: the us-scale custom-call cost dwarfs the sub-us add.
    #  * broadcasting operands: XLA never materializes the broadcast in HBM,
    #    which is already minimum traffic (materializing broadcast_to for a
    #    Pallas slab would ~double it for bias-like adds).
    #  * awkward element counts: padding inputs / slicing output adds full HBM
    #    passes, strictly worse than XLA's bandwidth-optimal fused add.
    # TODO(synk): if broadcast (bias-like) adds become hot, keep the small
    # operand resident in VMEM via a BlockSpec whose index_map returns (0, 0)
    # every step and broadcast it on the VPU inside the kernel.
    if (
        n == 0
        or n * max_itemsize < _FASTPATH_BYTES
        or t.shape != out_shape
        or v.shape != out_shape
    ):
        return (t + v).astype(out_dtype)

    width = _pick_width(n, sublane_mult)
    if width == 0:
        return (t + v).astype(out_dtype)

    rows = n // width
    t2 = t.reshape(rows, width)  # contiguous reshape: no HBM copy
    v2 = v.reshape(rows, width)

    # ---- tile sizing: total live bytes across all three buffers ~= 3*target,
    #      so the double-buffered footprint stays ~6x target for any dtype mix.
    target = _target_block_bytes()  # 2 MiB (v5e/v6e) or 4 MiB (v7x) per buffer
    tile_rows = (3 * target) // (width * sum_itemsize)
    tile_rows = max(sublane_mult, (tile_rows // sublane_mult) * sublane_mult)
    if tile_rows >= rows:
        # Keep >= 2 grid steps so dimension_semantics=("parallel",) can shard
        # across v7x's two TensorCores; negligible extra step cost on v5e/v6e.
        half = pl.cdiv(rows, 2)
        half = pl.cdiv(half, sublane_mult) * sublane_mult
        tile_rows = min(rows, max(sublane_mult, half))
    grid = (pl.cdiv(rows, tile_rows),)  # partial boundary block masked by Pallas

    # Double-buffered live footprint = 2 * 3 * target; leave a little slack.
    vmem_limit = min(64 * 1024 * 1024, 2 * 3 * target + 4 * 1024 * 1024)

    out2 = pl.pallas_call(
        _add_kernel,
        out_shape=jax.ShapeDtypeStruct((rows, width), out_dtype),
        grid_spec=pltpu.PrefetchScalarGridSpec(
            num_scalar_prefetch=0,
            grid=grid,
            in_specs=[
                pl.BlockSpec((tile_rows, width), lambda i: (i, 0)),
                pl.BlockSpec((tile_rows, width), lambda i: (i, 0)),
            ],
            out_specs=pl.BlockSpec((tile_rows, width), lambda i: (i, 0)),
        ),
        compiler_params=pltpu.CompilerParams(
            dimension_semantics=("parallel",),  # megacore sharding on v7x
            vmem_limit_bytes=vmem_limit,
        ),
    )(t2, v2)

    return out2.reshape(out_shape)


if __name__ == "__main__":
    key = jax.random.PRNGKey(0)
    k1, k2, k3, k4 = jax.random.split(key, 4)

    # Small NCHW feature maps (typical fusion inputs) -> small-tensor fast path.
    t_small = jax.random.normal(k1, (2, 4, 16, 16), dtype=jnp.float32)
    v_small = jax.random.normal(k2, (2, 4, 16, 16), dtype=jnp.float32)
    out_small = addition_fusion(t_small, v_small)
    jax.block_until_ready(out_small)
    ref_small = t_small + v_small
    assert out_small.shape == ref_small.shape and out_small.dtype == ref_small.dtype
    assert jnp.allclose(out_small, ref_small, atol=1e-6, rtol=1e-6)

    # Larger feature maps -> exercises the Pallas slab / tiled-grid path.
    t_big = jax.random.normal(k3, (2, 4, 128, 128), dtype=jnp.float32)
    v_big = jax.random.normal(k4, (2, 4, 128, 128), dtype=jnp.float32)
    out_big = addition_fusion(t_big, v_big)
    jax.block_until_ready(out_big)
    ref_big = t_big + v_big
    assert out_big.shape == ref_big.shape and out_big.dtype == ref_big.dtype
    assert jnp.allclose(out_big, ref_big, atol=1e-6, rtol=1e-6)

    print("KERNEL_OK")
</pallas_src>

<mosaic_0001>
module attributes {stable_mosaic.version = 11 : i64} {
  func.func @_add_kernel(%arg0: i32, %arg1: memref<8x8192xf32, #tpu.memory_space<vmem>>, %arg2: memref<8x8192xf32, #tpu.memory_space<vmem>>, %arg3: memref<8x8192xf32, #tpu.memory_space<vmem>>) attributes {dimension_semantics = [#tpu.dimension_semantics<parallel>], iteration_bounds = array<i64: 2>, scalar_prefetch = 0 : i64, scratch_operands = 0 : i64, tpu.core_type = #tpu.core_type<tc>, window_params = [{transform_indices = @transform_0, window_bounds = array<i64: 8, 8192>}, {transform_indices = @transform_1, window_bounds = array<i64: 8, 8192>}, {transform_indices = @transform_2, window_bounds = array<i64: 8, 8192>}]} {
    %c0 = arith.constant 0 : index
    %c0_0 = arith.constant 0 : index
    %0 = vector.load %arg1[%c0, %c0_0] : memref<8x8192xf32, #tpu.memory_space<vmem>>, vector<8x8192xf32>
    %c0_1 = arith.constant 0 : index
    %c0_2 = arith.constant 0 : index
    %1 = vector.load %arg2[%c0_1, %c0_2] : memref<8x8192xf32, #tpu.memory_space<vmem>>, vector<8x8192xf32>
    %2 = arith.addf %0, %1 : vector<8x8192xf32>
    %c0_3 = arith.constant 0 : index
    %c0_4 = arith.constant 0 : index
    %3 = vector.load %arg3[%c0_3, %c0_4] : memref<8x8192xf32, #tpu.memory_space<vmem>>, vector<8x8192xf32>
    tpu.vector_store %arg3[%c0_3, %c0_4], %2 {strides = array<i32>} : memref<8x8192xf32, #tpu.memory_space<vmem>>, vector<8x8192xf32>,
    return
  }
  func.func @transform_0(%arg0: i32) -> (i32, i32) {
    %c0_i32 = arith.constant 0 : i32
    %c0_i32_0 = arith.constant 0 : i32
    return %arg0, %c0_i32 : i32, i32
  }
  func.func @transform_1(%arg0: i32) -> (i32, i32) {
    %c0_i32 = arith.constant 0 : i32
    %c0_i32_0 = arith.constant 0 : i32
    return %arg0, %c0_i32 : i32, i32
  }
  func.func @transform_2(%arg0: i32) -> (i32, i32) {
    %c0_i32 = arith.constant 0 : i32
    %c0_i32_0 = arith.constant 0 : i32
    return %arg0, %c0_i32 : i32, i32
  }
}

</mosaic_0001>

<llo_original>
// kernel: tpu_custom_call.1
$region0: #{tpu_custom_call.1}
  #allocation0 [shape = 'u32[]', space=smem, size = 0x4, offset = 0x4, fixed_abs, tag = 'smem constant byte address 0x4 - core index']
  #allocation1 [shape = 'u32[72,128]{1,0:T(1,128)}', space=vmem, size = 0x9000, scoped, tag = 'internal scratch']
  %s0 = inlined_call_operand.hbm [shape: f32[16,8192], index: 0, kind: input, shape index: {}]
  %s1 = inlined_call_operand.hbm [shape: f32[16,8192], index: 1, kind: input, shape index: {}]
  %s2 = inlined_call_operand.hbm [shape: f32[16,8192], index: 2, kind: output, shape index: {}]
  %s3 = sld [smem:[#allocation0]]
  $region49: #{tpu_custom_call.1} parent=0
    _
  %s5 = ssub.s32 1, %s3
  %s6 = scalar_select 0, %s5, %s3
  $region1: #{tpu_custom_call.1} parent=0
    #allocation2 [shape = 'u8[524288]{0}', space=vmem, size = 0x80000, scoped, tag = 'input window, operand 0']
    #allocation3 [shape = 's32[2]{0}', space=sflag, size = 0x8, scoped, tag = 'scoped memory for tpu_custom_call.1']
    #allocation4 [shape = 's32[2]{0}', space=sflag, size = 0x8, scoped, tag = 'scoped memory for tpu_custom_call.1']
    #allocation5 [shape = 'u8[524288]{0}', space=vmem, size = 0x80000, scoped, tag = 'input window, operand 1']
    #allocation6 [shape = 's32[2]{0}', space=sflag, size = 0x8, scoped, tag = 'scoped memory for tpu_custom_call.1']
    #allocation7 [shape = 'u8[524288]{0}', space=vmem, size = 0x80000, scoped, tag = 'output window, operand 0']
    %7 = vsyncpa [#allocation3], 0
    %s8 = scalar_lea.sflag [#allocation3], 1
    %9 = vsyncpa %s8, 0
    %10 = vsyncpa [#allocation6], 0
    %s11 = scalar_lea.sflag [#allocation6], 1
    %12 = vsyncpa %s11, 0
    %13 = vsyncpa [#allocation4], 0
    %s14 = scalar_lea.sflag [#allocation4], 1
    %15 = vsyncpa %s14, 0
    loop: start=0, step=1, limit=4
    $region2: #{tpu_custom_call.1} parent=1 // loop_pre_header
      _
    $region3: #{tpu_custom_call.1} parent=1 // loop_header
      %s17 = sphi 0, %s21
      %p18 = scmp.ge.s32.totalorder %s17, 4
      %s27 = sphi 0, %s29
      %s30 = sphi 0, %s27
      %s31 = sphi 0, %s30
      %s47 = sphi 0, %s31
      %s53 = sphi 0, %s55
      %s56 = sphi 0, %s53
      %s57 = sphi 0, %s56
      %s73 = sphi 0, %s57
      %s79 = sphi 0, %s81
      %s82 = sphi 0, %s79
      %s83 = sphi 0, %s82
      %s99 = sphi 0, %s83
    $region4: #{tpu_custom_call.1} parent=1 // loop_header_branch
      %20 = sbr.rel (%p18) target = $region8
    $region5: #{tpu_custom_call.1} parent=1 // loop_body
      %s22 = ssub.s32 %s17, 1
      %s23 = ssub.s32 %s17, 2
      %s24 = sadd.s32 %s17, 1
      %s25 = ssub.s32 %s17, %s24
      %p26 = scmp.eq.s32.totalorder %s25, 0
      %s28 = sadd.s32 %s27, 1
      %s29 = scalar_select %p26, %s27, %s28
      %p32 = pneg %p26
      %p33 = scmp.eq.s32.totalorder %s17, 1
      %p34 = por %p32, %p33
      %p35 = scmp.ne.s32.totalorder %s27, %s30
      %p36 = scmp.eq.s32.totalorder %s17, 0
      %p37 = por %p35, %p36
      %p38 = scmp.ne.s32.totalorder %s27, %s30
      %p39 = scmp.eq.s32.totalorder %s22, 1
      %p40 = por %p38, %p39
      %p41 = scmp.ne.s32.totalorder %s30, %s31
      %p42 = scmp.eq.s32.totalorder %s22, 0
      %p43 = por %p41, %p42
      %p44 = scmp.ne.s32.totalorder %s30, %s31
      %p45 = scmp.eq.s32.totalorder %s23, 1
      %p46 = por %p44, %p45
      %p48 = scmp.ne.s32.totalorder %s31, %s47
      %p49 = scmp.eq.s32.totalorder %s23, 0
      %p50 = por %p48, %p49
      %s51 = ssub.s32 %s17, %s24
      %p52 = scmp.eq.s32.totalorder %s51, 0
      %s54 = sadd.s32 %s53, 1
      %s55 = scalar_select %p52, %s53, %s54
      %p58 = pneg %p52
      %p59 = scmp.eq.s32.totalorder %s17, 1
      %p60 = por %p58, %p59
      %p61 = scmp.ne.s32.totalorder %s53, %s56
      %p62 = scmp.eq.s32.totalorder %s17, 0
      %p63 = por %p61, %p62
      %p64 = scmp.ne.s32.totalorder %s53, %s56
      %p65 = scmp.eq.s32.totalorder %s22, 1
      %p66 = por %p64, %p65
      %p67 = scmp.ne.s32.totalorder %s56, %s57
      %p68 = scmp.eq.s32.totalorder %s22, 0
      %p69 = por %p67, %p68
      %p70 = scmp.ne.s32.totalorder %s56, %s57
      %p71 = scmp.eq.s32.totalorder %s23, 1
      %p72 = por %p70, %p71
      %p74 = scmp.ne.s32.totalorder %s57, %s73
      %p75 = scmp.eq.s32.totalorder %s23, 0
      %p76 = por %p74, %p75
      %s77 = ssub.s32 %s17, %s24
      %p78 = scmp.eq.s32.totalorder %s77, 0
      %s80 = sadd.s32 %s79, 1
      %s81 = scalar_select %p78, %s79, %s80
      %p84 = pneg %p78
      %p85 = scmp.eq.s32.totalorder %s17, 1
      %p86 = por %p84, %p85
      %p87 = scmp.ne.s32.totalorder %s79, %s82
      %p88 = scmp.eq.s32.totalorder %s17, 0
      %p89 = por %p87, %p88
      %p90 = scmp.ne.s32.totalorder %s79, %s82
      %p91 = scmp.eq.s32.totalorder %s22, 1
      %p92 = por %p90, %p91
      %p93 = scmp.ne.s32.totalorder %s82, %s83
      %p94 = scmp.eq.s32.totalorder %s22, 0
      %p95 = por %p93, %p94
      %p96 = scmp.ne.s32.totalorder %s82, %s83
      %p97 = scmp.eq.s32.totalorder %s23, 1
      %p98 = por %p96, %p97
      %p100 = scmp.ne.s32.totalorder %s83, %s99
      %p101 = scmp.eq.s32.totalorder %s23, 0
      %p102 = por %p100, %p101
      %p103 = scmp.le.s32.totalorder 1, %s17
      %p104 = scmp.lt.s32.totalorder %s17, 3
      %p105 = pnand %p103, %p104
      %p106 = pneg %p105
      // Predicated region
      $region9: #{tpu_custom_call.1} parent=5 // pred_check
        _
      $region10: #{tpu_custom_call.1} parent=5 // pred_check_branch
        %108 = sbr.rel (%p105) target = $region12
      $region11: #{tpu_custom_call.1} parent=5 // pred_region
        %s109 = ssub.s32 %s17, 1
      $region12: #{tpu_custom_call.1} parent=5 // pred_fallthru
        _
      %p110 = scmp.lt.s32.totalorder %s17, 2
      // Predicated region
      $region13: #{tpu_custom_call.1} parent=5 // pred_check
        %p111 = pneg %p110
      $region14: #{tpu_custom_call.1} parent=5 // pred_check_branch
        %113 = sbr.rel (%p111) target = $region16
      $region15: #{tpu_custom_call.1} parent=5 // pred_region
        // Predicated region
        $region17: #{tpu_custom_call.1} parent=15 // pred_check
          %p114 = pneg %p37
        $region18: #{tpu_custom_call.1} parent=15 // pred_check_branch
          %116 = sbr.rel (%p114) target = $region20
        $region19: #{tpu_custom_call.1} parent=15 // pred_region
          %s117 = sand.u32 %s27, 1
          %s118 = scalar_lea.sflag [#allocation3], %s117
          %s119 = sand.u32 %s27, 1
          %s120 = smul.addr %s119, 512
          %s121 = scalar_lea.vmem [#allocation2], %s120
          %123 = vsyncadd %s118, 0
          %s124 = smul.addr %s17, 64
          %s125 = smul.addr %s124, 8
          %s126 = scalar_lea.hbm %s0, %s125
          %s128 = sshll.u32 %s126, 4
          %s129 = int_to_ptr.hbm [resolvable:$true] %s128
          %s130 = sshll.u32 %s121, 4
          %s131 = int_to_ptr.vmem [resolvable:$true] %s130
          %133 = dma.hbm_to_vmem [thread:$0]  %s129, 8192, %s131, %s118
        $region20: #{tpu_custom_call.1} parent=15 // pred_fallthru
          _
        // Predicated region
        $region21: #{tpu_custom_call.1} parent=15 // pred_check
          %p134 = pneg %p63
        $region22: #{tpu_custom_call.1} parent=15 // pred_check_branch
          %136 = sbr.rel (%p134) target = $region24
        $region23: #{tpu_custom_call.1} parent=15 // pred_region
          %s137 = sand.u32 %s53, 1
          %s138 = scalar_lea.sflag [#allocation6], %s137
          %s139 = sand.u32 %s53, 1
          %s140 = smul.addr %s139, 512
          %s141 = scalar_lea.vmem [#allocation5], %s140
          %143 = vsyncadd %s138, 0
          %s144 = smul.addr %s17, 64
          %s145 = smul.addr %s144, 8
          %s146 = scalar_lea.hbm %s1, %s145
          %s148 = sshll.u32 %s146, 4
          %s149 = int_to_ptr.hbm [resolvable:$true] %s148
          %s150 = sshll.u32 %s141, 4
          %s151 = int_to_ptr.vmem [resolvable:$true] %s150
          %153 = dma.hbm_to_vmem [thread:$0]  %s149, 8192, %s151, %s138
        $region24: #{tpu_custom_call.1} parent=15 // pred_fallthru
          _
      $region16: #{tpu_custom_call.1} parent=5 // pred_fallthru
        _
      %p154 = scmp.le.s32.totalorder 1, %s17
      %p155 = scmp.lt.s32.totalorder %s17, 3
      %p156 = pnand %p154, %p155
      %p157 = pneg %p156
      // Predicated region
      $region25: #{tpu_custom_call.1} parent=5 // pred_check
        _
      $region26: #{tpu_custom_call.1} parent=5 // pred_check_branch
        %159 = sbr.rel (%p156) target = $region28
      $region27: #{tpu_custom_call.1} parent=5 // pred_region
        %s160 = ssub.s32 %s17, 1
        %s161 = sand.u32 %s30, 1
        %s162 = scalar_lea.sflag [#allocation3], %s161
        %s163 = sand.u32 %s30, 1
        %s164 = smul.addr %s163, 512
        %s165 = scalar_lea.vmem [#allocation2], %s164
        // Predicated region
        $region29: #{tpu_custom_call.1} parent=27 // pred_check
          %p166 = pneg %p43
        $region30: #{tpu_custom_call.1} parent=27 // pred_check_branch
          %168 = sbr.rel (%p166) target = $region32
        $region31: #{tpu_custom_call.1} parent=27 // pred_region
          %170 = dma.done %s162, 8192
        $region32: #{tpu_custom_call.1} parent=27 // pred_fallthru
          _
        %s171 = sand.u32 %s56, 1
        %s172 = scalar_lea.sflag [#allocation6], %s171
        %s173 = sand.u32 %s56, 1
        %s174 = smul.addr %s173, 512
        %s175 = scalar_lea.vmem [#allocation5], %s174
        // Predicated region
        $region33: #{tpu_custom_call.1} parent=27 // pred_check
          %p176 = pneg %p69
        $region34: #{tpu_custom_call.1} parent=27 // pred_check_branch
          %178 = sbr.rel (%p176) target = $region36
        $region35: #{tpu_custom_call.1} parent=27 // pred_region
          %180 = dma.done %s172, 8192
        $region36: #{tpu_custom_call.1} parent=27 // pred_fallthru
          _
        %s181 = sand.u32 %s30, 1
        %s182 = scalar_lea.sflag [#allocation3], %s181
        %s183 = sand.u32 %s30, 1
        %s184 = smul.addr %s183, 512
        %s185 = scalar_lea.vmem [#allocation2], %s184
        %p186 = pneg %p43
        %p187 = pneg %p40
        %s188 = sand.u32 %s56, 1
        %s189 = scalar_lea.sflag [#allocation6], %s188
        %s190 = sand.u32 %s56, 1
        %s191 = smul.addr %s190, 512
        %s192 = scalar_lea.vmem [#allocation5], %s191
        %p193 = pneg %p69
        %p194 = pneg %p66
        %p195 = pneg %p95
        %p196 = pneg %p92
        %s197 = sand.u32 %s82, 1
        %s198 = scalar_lea.sflag [#allocation4], %s197
        %s199 = sand.u32 %s82, 1
        %s200 = smul.addr %s199, 512
        %s201 = scalar_lea.vmem [#allocation7], %s200
        %v202 = vld [vmem:[%s165] sm:$0xff]
        %v203 = vld [vmem:[%s165 + $0x8] sm:$0xff]
        %v204 = vld [vmem:[%s165 + $0x10] sm:$0xff]
        %v205 = vld [vmem:[%s165 + $0x18] sm:$0xff]
        %v206 = vld [vmem:[%s165 + $0x20] sm:$0xff]
        %v207 = vld [vmem:[%s165 + $0x28] sm:$0xff]
        %v208 = vld [vmem:[%s165 + $0x30] sm:$0xff]
        %v209 = vld [vmem:[%s165 + $0x38] sm:$0xff]
        %v210 = vld [vmem:[%s165 + $0x40] sm:$0xff]
        %v211 = vld [vmem:[%s165 + $0x48] sm:$0xff]
        %v212 = vld [vmem:[%s165 + $0x50] sm:$0xff]
        %v213 = vld [vmem:[%s165 + $0x58] sm:$0xff]
        %v214 = vld [vmem:[%s165 + $0x60] sm:$0xff]
        %v215 = vld [vmem:[%s165 + $0x68] sm:$0xff]
        %v216 = vld [vmem:[%s165 + $0x70] sm:$0xff]
        %v217 = vld [vmem:[%s165 + $0x78] sm:$0xff]
        %v218 = vld [vmem:[%s165 + $0x80] sm:$0xff]
        %v219 = vld [vmem:[%s165 + $0x88] sm:$0xff]
        %v220 = vld [vmem:[%s165 + $0x90] sm:$0xff]
        %v221 = vld [vmem:[%s165 + $0x98] sm:$0xff]
        %v222 = vld [vmem:[%s165 + $0xa0] sm:$0xff]
        %v223 = vld [vmem:[%s165 + $0xa8] sm:$0xff]
        %v224 = vld [vmem:[%s165 + $0xb0] sm:$0xff]
        %v225 = vld [vmem:[%s165 + $0xb8] sm:$0xff]
        %v226 = vld [vmem:[%s165 + $0xc0] sm:$0xff]
        %v227 = vld [vmem:[%s165 + $0xc8] sm:$0xff]
        %v228 = vld [vmem:[%s165 + $0xd0] sm:$0xff]
        %v229 = vld [vmem:[%s165 + $0xd8] sm:$0xff]
        %v230 = vld [vmem:[%s165 + $0xe0] sm:$0xff]
        %v231 = vld [vmem:[%s165 + $0xe8] sm:$0xff]
        %v232 = vld [vmem:[%s165 + $0xf0] sm:$0xff]
        %v233 = vld [vmem:[%s165 + $0xf8] sm:$0xff]
        %v234 = vld [vmem:[%s165 + $0x100] sm:$0xff]
        %v235 = vld [vmem:[%s165 + $0x108] sm:$0xff]
        %v236 = vld [vmem:[%s165 + $0x110] sm:$0xff]
        %v237 = vld [vmem:[%s165 + $0x118] sm:$0xff]
        %v238 = vld [vmem:[%s165 + $0x120] sm:$0xff]
        %v239 = vld [vmem:[%s165 + $0x128] sm:$0xff]
        %v240 = vld [vmem:[%s165 + $0x130] sm:$0xff]
        %v241 = vld [vmem:[%s165 + $0x138] sm:$0xff]
        %v242 = vld [vmem:[%s165 + $0x140] sm:$0xff]
        %v243 = vld [vmem:[%s165 + $0x148] sm:$0xff]
        %v244 = vld [vmem:[%s165 + $0x150] sm:$0xff]
        %v245 = vld [vmem:[%s165 + $0x158] sm:$0xff]
        %v246 = vld [vmem:[%s165 + $0x160] sm:$0xff]
        %v247 = vld [vmem:[%s165 + $0x168] sm:$0xff]
        %v248 = vld [vmem:[%s165 + $0x170] sm:$0xff]
        %v249 = vld [vmem:[%s165 + $0x178] sm:$0xff]
        %v250 = vld [vmem:[%s165 + $0x180] sm:$0xff]
        %v251 = vld [vmem:[%s165 + $0x188] sm:$0xff]
        %v252 = vld [vmem:[%s165 + $0x190] sm:$0xff]
        %v253 = vld [vmem:[%s165 + $0x198] sm:$0xff]
        %v254 = vld [vmem:[%s165 + $0x1a0] sm:$0xff]
        %v255 = vld [vmem:[%s165 + $0x1a8] sm:$0xff]
        %v256 = vld [vmem:[%s165 + $0x1b0] sm:$0xff]
        %v257 = vld [vmem:[%s165 + $0x1b8] sm:$0xff]
        %v258 = vld [vmem:[%s165 + $0x1c0] sm:$0xff]
        %v259 = vld [vmem:[%s165 + $0x1c8] sm:$0xff]
        %v260 = vld [vmem:[%s165 + $0x1d0] sm:$0xff]
        %v261 = vld [vmem:[%s165 + $0x1d8] sm:$0xff]
        %v262 = vld [vmem:[%s165 + $0x1e0] sm:$0xff]
        %v263 = vld [vmem:[%s165 + $0x1e8] sm:$0xff]
        %v264 = vld [vmem:[%s165 + $0x1f0] sm:$0xff]
        %v265 = vld [vmem:[%s165 + $0x1f8] sm:$0xff]
        %v266 = vld [vmem:[%s175] sm:$0xff]
        %v267 = vld [vmem:[%s175 + $0x8] sm:$0xff]
        %v268 = vld [vmem:[%s175 + $0x10] sm:$0xff]
        %v269 = vld [vmem:[%s175 + $0x18] sm:$0xff]
        %v270 = vld [vmem:[%s175 + $0x20] sm:$0xff]
        %v271 = vld [vmem:[%s175 + $0x28] sm:$0xff]
        %v272 = vld [vmem:[%s175 + $0x30] sm:$0xff]
        %v273 = vld [vmem:[%s175 + $0x38] sm:$0xff]
        %v274 = vld [vmem:[%s175 + $0x40] sm:$0xff]
        %v275 = vld [vmem:[%s175 + $0x48] sm:$0xff]
        %v276 = vld [vmem:[%s175 + $0x50] sm:$0xff]
        %v277 = vld [vmem:[%s175 + $0x58] sm:$0xff]
        %v278 = vld [vmem:[%s175 + $0x60] sm:$0xff]
        %v279 = vld [vmem:[%s175 + $0x68] sm:$0xff]
        %v280 = vld [vmem:[%s175 + $0x70] sm:$0xff]
        %v281 = vld [vmem:[%s175 + $0x78] sm:$0xff]
        %v282 = vld [vmem:[%s175 + $0x80] sm:$0xff]
        %v283 = vld [vmem:[%s175 + $0x88] sm:$0xff]
        %v284 = vld [vmem:[%s175 + $0x90] sm:$0xff]
        %v285 = vld [vmem:[%s175 + $0x98] sm:$0xff]
        %v286 = vld [vmem:[%s175 + $0xa0] sm:$0xff]
        %v287 = vld [vmem:[%s175 + $0xa8] sm:$0xff]
        %v288 = vld [vmem:[%s175 + $0xb0] sm:$0xff]
        %v289 = vld [vmem:[%s175 + $0xb8] sm:$0xff]
        %v290 = vld [vmem:[%s175 + $0xc0] sm:$0xff]
        %v291 = vld [vmem:[%s175 + $0xc8] sm:$0xff]
        %v292 = vld [vmem:[%s175 + $0xd0] sm:$0xff]
        %v293 = vld [vmem:[%s175 + $0xd8] sm:$0xff]
        %v294 = vld [vmem:[%s175 + $0xe0] sm:$0xff]
        %v295 = vld [vmem:[%s175 + $0xe8] sm:$0xff]
        %v296 = vld [vmem:[%s175 + $0xf0] sm:$0xff]
        %v297 = vld [vmem:[%s175 + $0xf8] sm:$0xff]
        %v298 = vld [vmem:[%s175 + $0x100] sm:$0xff]
        %v299 = vld [vmem:[%s175 + $0x108] sm:$0xff]
        %v300 = vld [vmem:[%s175 + $0x110] sm:$0xff]
        %v301 = vld [vmem:[%s175 + $0x118] sm:$0xff]
        %v302 = vld [vmem:[%s175 + $0x120] sm:$0xff]
        %v303 = vld [vmem:[%s175 + $0x128] sm:$0xff]
        %v304 = vld [vmem:[%s175 + $0x130] sm:$0xff]
        %v305 = vld [vmem:[%s175 + $0x138] sm:$0xff]
        %v306 = vld [vmem:[%s175 + $0x140] sm:$0xff]
        %v307 = vld [vmem:[%s175 + $0x148] sm:$0xff]
        %v308 = vld [vmem:[%s175 + $0x150] sm:$0xff]
        %v309 = vld [vmem:[%s175 + $0x158] sm:$0xff]
        %v310 = vld [vmem:[%s175 + $0x160] sm:$0xff]
        %v311 = vld [vmem:[%s175 + $0x168] sm:$0xff]
        %v312 = vld [vmem:[%s175 + $0x170] sm:$0xff]
        %v313 = vld [vmem:[%s175 + $0x178] sm:$0xff]
        %v314 = vld [vmem:[%s175 + $0x180] sm:$0xff]
        %v315 = vld [vmem:[%s175 + $0x188] sm:$0xff]
        %v316 = vld [vmem:[%s175 + $0x190] sm:$0xff]
        %v317 = vld [vmem:[%s175 + $0x198] sm:$0xff]
        %v318 = vld [vmem:[%s175 + $0x1a0] sm:$0xff]
        %v319 = vld [vmem:[%s175 + $0x1a8] sm:$0xff]
        %v320 = vld [vmem:[%s175 + $0x1b0] sm:$0xff]
        %v321 = vld [vmem:[%s175 + $0x1b8] sm:$0xff]
        %v322 = vld [vmem:[%s175 + $0x1c0] sm:$0xff]
        %v323 = vld [vmem:[%s175 + $0x1c8] sm:$0xff]
        %v324 = vld [vmem:[%s175 + $0x1d0] sm:$0xff]
        %v325 = vld [vmem:[%s175 + $0x1d8] sm:$0xff]
        %v326 = vld [vmem:[%s175 + $0x1e0] sm:$0xff]
        %v327 = vld [vmem:[%s175 + $0x1e8] sm:$0xff]
        %v328 = vld [vmem:[%s175 + $0x1f0] sm:$0xff]
        %v329 = vld [vmem:[%s175 + $0x1f8] sm:$0xff]
        %v330 = vadd.f32 %v202, %v266
        %v331 = vadd.f32 %v203, %v267
        %v332 = vadd.f32 %v204, %v268
        %v333 = vadd.f32 %v205, %v269
        %v334 = vadd.f32 %v206, %v270
        %v335 = vadd.f32 %v207, %v271
        %v336 = vadd.f32 %v208, %v272
        %v337 = vadd.f32 %v209, %v273
        %v338 = vadd.f32 %v210, %v274
        %v339 = vadd.f32 %v211, %v275
        %v340 = vadd.f32 %v212, %v276
        %v341 = vadd.f32 %v213, %v277
        %v342 = vadd.f32 %v214, %v278
        %v343 = vadd.f32 %v215, %v279
        %v344 = vadd.f32 %v216, %v280
        %v345 = vadd.f32 %v217, %v281
        %v346 = vadd.f32 %v218, %v282
        %v347 = vadd.f32 %v219, %v283
        %v348 = vadd.f32 %v220, %v284
        %v349 = vadd.f32 %v221, %v285
        %v350 = vadd.f32 %v222, %v286
        %v351 = vadd.f32 %v223, %v287
        %v352 = vadd.f32 %v224, %v288
        %v353 = vadd.f32 %v225, %v289
        %v354 = vadd.f32 %v226, %v290
        %v355 = vadd.f32 %v227, %v291
        %v356 = vadd.f32 %v228, %v292
        %v357 = vadd.f32 %v229, %v293
        %v358 = vadd.f32 %v230, %v294
        %v359 = vadd.f32 %v231, %v295
        %v360 = vadd.f32 %v232, %v296
        %v361 = vadd.f32 %v233, %v297
        %v362 = vadd.f32 %v234, %v298
        %v363 = vadd.f32 %v235, %v299
        %v364 = vadd.f32 %v236, %v300
        %v365 = vadd.f32 %v237, %v301
        %v366 = vadd.f32 %v238, %v302
        %v367 = vadd.f32 %v239, %v303
        %v368 = vadd.f32 %v240, %v304
        %v369 = vadd.f32 %v241, %v305
        %v370 = vadd.f32 %v242, %v306
        %v371 = vadd.f32 %v243, %v307
        %v372 = vadd.f32 %v244, %v308
        %v373 = vadd.f32 %v245, %v309
        %v374 = vadd.f32 %v246, %v310
        %v375 = vadd.f32 %v247, %v311
        %v376 = vadd.f32 %v248, %v312
        %v377 = vadd.f32 %v249, %v313
        %v378 = vadd.f32 %v250, %v314
        %v379 = vadd.f32 %v251, %v315
        %v380 = vadd.f32 %v252, %v316
        %v381 = vadd.f32 %v253, %v317
        %v382 = vadd.f32 %v254, %v318
        %v383 = vadd.f32 %v255, %v319
        %v384 = vadd.f32 %v256, %v320
        %v385 = vadd.f32 %v257, %v321
        %v386 = vadd.f32 %v258, %v322
        %v387 = vadd.f32 %v259, %v323
        %v388 = vadd.f32 %v260, %v324
        %v389 = vadd.f32 %v261, %v325
        %v390 = vadd.f32 %v262, %v326
        %v391 = vadd.f32 %v263, %v327
        %v392 = vadd.f32 %v264, %v328
        %v393 = vadd.f32 %v265, %v329
        %394 = vst [vmem:[%s201] sm:$0xff] %v330
        %395 = vst [vmem:[%s201 + $0x8] sm:$0xff] %v331
        %396 = vst [vmem:[%s201 + $0x10] sm:$0xff] %v332
        %397 = vst [vmem:[%s201 + $0x18] sm:$0xff] %v333
        %398 = vst [vmem:[%s201 + $0x20] sm:$0xff] %v334
        %399 = vst [vmem:[%s201 + $0x28] sm:$0xff] %v335
        %400 = vst [vmem:[%s201 + $0x30] sm:$0xff] %v336
        %401 = vst [vmem:[%s201 + $0x38] sm:$0xff] %v337
        %402 = vst [vmem:[%s201 + $0x40] sm:$0xff] %v338
        %403 = vst [vmem:[%s201 + $0x48] sm:$0xff] %v339
        %404 = vst [vmem:[%s201 + $0x50] sm:$0xff] %v340
        %405 = vst [vmem:[%s201 + $0x58] sm:$0xff] %v341
        %406 = vst [vmem:[%s201 + $0x60] sm:$0xff] %v342
        %407 = vst [vmem:[%s201 + $0x68] sm:$0xff] %v343
        %408 = vst [vmem:[%s201 + $0x70] sm:$0xff] %v344
        %409 = vst [vmem:[%s201 + $0x78] sm:$0xff] %v345
        %410 = vst [vmem:[%s201 + $0x80] sm:$0xff] %v346
        %411 = vst [vmem:[%s201 + $0x88] sm:$0xff] %v347
        %412 = vst [vmem:[%s201 + $0x90] sm:$0xff] %v348
        %413 = vst [vmem:[%s201 + $0x98] sm:$0xff] %v349
        %414 = vst [vmem:[%s201 + $0xa0] sm:$0xff] %v350
        %415 = vst [vmem:[%s201 + $0xa8] sm:$0xff] %v351
        %416 = vst [vmem:[%s201 + $0xb0] sm:$0xff] %v352
        %417 = vst [vmem:[%s201 + $0xb8] sm:$0xff] %v353
        %418 = vst [vmem:[%s201 + $0xc0] sm:$0xff] %v354
        %419 = vst [vmem:[%s201 + $0xc8] sm:$0xff] %v355
        %420 = vst [vmem:[%s201 + $0xd0] sm:$0xff] %v356
        %421 = vst [vmem:[%s201 + $0xd8] sm:$0xff] %v357
        %422 = vst [vmem:[%s201 + $0xe0] sm:$0xff] %v358
        %423 = vst [vmem:[%s201 + $0xe8] sm:$0xff] %v359
        %424 = vst [vmem:[%s201 + $0xf0] sm:$0xff] %v360
        %425 = vst [vmem:[%s201 + $0xf8] sm:$0xff] %v361
        %426 = vst [vmem:[%s201 + $0x100] sm:$0xff] %v362
        %427 = vst [vmem:[%s201 + $0x108] sm:$0xff] %v363
        %428 = vst [vmem:[%s201 + $0x110] sm:$0xff] %v364
        %429 = vst [vmem:[%s201 + $0x118] sm:$0xff] %v365
        %430 = vst [vmem:[%s201 + $0x120] sm:$0xff] %v366
        %431 = vst [vmem:[%s201 + $0x128] sm:$0xff] %v367
        %432 = vst [vmem:[%s201 + $0x130] sm:$0xff] %v368
        %433 = vst [vmem:[%s201 + $0x138] sm:$0xff] %v369
        %434 = vst [vmem:[%s201 + $0x140] sm:$0xff] %v370
        %435 = vst [vmem:[%s201 + $0x148] sm:$0xff] %v371
        %436 = vst [vmem:[%s201 + $0x150] sm:$0xff] %v372
        %437 = vst [vmem:[%s201 + $0x158] sm:$0xff] %v373
        %438 = vst [vmem:[%s201 + $0x160] sm:$0xff] %v374
        %439 = vst [vmem:[%s201 + $0x168] sm:$0xff] %v375
        %440 = vst [vmem:[%s201 + $0x170] sm:$0xff] %v376
        %441 = vst [vmem:[%s201 + $0x178] sm:$0xff] %v377
        %442 = vst [vmem:[%s201 + $0x180] sm:$0xff] %v378
        %443 = vst [vmem:[%s201 + $0x188] sm:$0xff] %v379
        %444 = vst [vmem:[%s201 + $0x190] sm:$0xff] %v380
        %445 = vst [vmem:[%s201 + $0x198] sm:$0xff] %v381
        %446 = vst [vmem:[%s201 + $0x1a0] sm:$0xff] %v382
        %447 = vst [vmem:[%s201 + $0x1a8] sm:$0xff] %v383
        %448 = vst [vmem:[%s201 + $0x1b0] sm:$0xff] %v384
        %449 = vst [vmem:[%s201 + $0x1b8] sm:$0xff] %v385
        %450 = vst [vmem:[%s201 + $0x1c0] sm:$0xff] %v386
        %451 = vst [vmem:[%s201 + $0x1c8] sm:$0xff] %v387
        %452 = vst [vmem:[%s201 + $0x1d0] sm:$0xff] %v388
        %453 = vst [vmem:[%s201 + $0x1d8] sm:$0xff] %v389
        %454 = vst [vmem:[%s201 + $0x1e0] sm:$0xff] %v390
        %455 = vst [vmem:[%s201 + $0x1e8] sm:$0xff] %v391
        %456 = vst [vmem:[%s201 + $0x1f0] sm:$0xff] %v392
        %457 = vst [vmem:[%s201 + $0x1f8] sm:$0xff] %v393
        %s458 = sand.u32 %s82, 1
        %s459 = scalar_lea.sflag [#allocation4], %s458
        %s460 = sand.u32 %s82, 1
        %s461 = smul.addr %s460, 512
        %s462 = scalar_lea.vmem [#allocation7], %s461
        // Predicated region
        $region37: #{tpu_custom_call.1} parent=27 // pred_check
          %p463 = pneg %p92
        $region38: #{tpu_custom_call.1} parent=27 // pred_check_branch
          %465 = sbr.rel (%p463) target = $region40
        $region39: #{tpu_custom_call.1} parent=27 // pred_region
          %467 = vsyncadd %s459, 0
          %s468 = smul.addr %s22, 64
          %s469 = smul.addr %s468, 8
          %s470 = scalar_lea.hbm %s2, %s469
          %s472 = sshll.u32 %s462, 4
          %s473 = int_to_ptr.vmem [resolvable:$true] %s472
          %s474 = sshll.u32 %s470, 4
          %s475 = int_to_ptr.hbm [resolvable:$true] %s474
          %477 = dma.vmem_to_hbm [thread:$0]  %s473, 8192, %s475, %s459
        $region40: #{tpu_custom_call.1} parent=27 // pred_fallthru
          _
      $region28: #{tpu_custom_call.1} parent=5 // pred_fallthru
        _
      %p478 = scmp.le.s32.totalorder 2, %s17
      // Predicated region
      $region41: #{tpu_custom_call.1} parent=5 // pred_check
        %p479 = pneg %p478
      $region42: #{tpu_custom_call.1} parent=5 // pred_check_branch
        %481 = sbr.rel (%p479) target = $region44
      $region43: #{tpu_custom_call.1} parent=5 // pred_region
        %s482 = ssub.s32 %s17, 2
        // Predicated region
        $region45: #{tpu_custom_call.1} parent=43 // pred_check
          %p483 = pneg %p98
        $region46: #{tpu_custom_call.1} parent=43 // pred_check_branch
          %485 = sbr.rel (%p483) target = $region48
        $region47: #{tpu_custom_call.1} parent=43 // pred_region
          %s486 = sand.u32 %s83, 1
          %s487 = scalar_lea.sflag [#allocation4], %s486
          %s488 = sand.u32 %s83, 1
          %s489 = smul.addr %s488, 512
          %s490 = scalar_lea.vmem [#allocation7], %s489
          %492 = dma.done %s487, 8192
        $region48: #{tpu_custom_call.1} parent=43 // pred_fallthru
          _
      $region44: #{tpu_custom_call.1} parent=5 // pred_fallthru
        _
    $region6: #{tpu_custom_call.1} parent=1 // loop_footer
      %s21 = sadd.s32 1, %s17
    $region7: #{tpu_custom_call.1} parent=1 // loop_footer_branch
      %16 = sbr.rel target = $region3
    $region8: #{tpu_custom_call.1} parent=1 // loop_exit
      _
    %493 = vsyncpa [#allocation3], 1
    %s494 = scalar_lea.sflag [#allocation3], 1
    %495 = vsyncpa %s494, 1
    %496 = vsyncpa [#allocation6], 1
    %s497 = scalar_lea.sflag [#allocation6], 1
    %498 = vsyncpa %s497, 1
    %499 = vsyncpa [#allocation4], 1
    %s500 = scalar_lea.sflag [#allocation4], 1
    %501 = vsyncpa %s500, 1

</llo_original>
